<compile_context>
chip_gen: v7x
topology: tpu7x:2x2x1
jax: 0.10.0
libtpu: 0.0.40
codegen_flags: <defaults>
</compile_context>

<pallas_src>
import jax
import jax.numpy as jnp
from jax import lax
from jax.experimental import pallas as pl
from jax.experimental.pallas import tpu as pltpu


def autopad(k, p=None, d=1):
    """Pad to 'same' shape outputs (scalar k only)."""
    if d > 1:
        k = d * (k - 1) + 1
    if p is None:
        p = k // 2
    return p


def _cdiv(a, b):
    return -(-a // b)


def _round_up(x, m):
    return _cdiv(x, m) * m


def _vmem_limit_bytes():
    """Per-generation VMEM limit: ~3/4 of physical capacity, capped at 96 MiB.
    (v7x: 64 MiB physical -> 48 MiB; v5e/v6e: 128 MiB -> 96 MiB)."""
    try:
        cap = int(pltpu.get_tpu_info().vmem_capacity_bytes)
    except Exception:
        cap = 0
    if cap <= 0:
        return 32 << 20
    return int(min(96 << 20, max(8 << 20, (cap * 3) // 4)))


# --------------------------------------------------------------------------
# Path 1: 1x1 conv (and wrapper-im2col fallback) as a tiled GEMM with a fused
#         folded-BN bias + SiLU epilogue.  Grid = (M tiles, Cout tiles).
# --------------------------------------------------------------------------
def _gemm_bias_silu_kernel(x_ref, w_ref, b_ref, o_ref):
    # x_ref: (TM, K)  activation tile, native dtype (no full-tensor f32 upcast)
    # w_ref: (K, TN)  BN-folded weight tile
    # b_ref: (1, TN)  BN-folded bias (f32)
    # o_ref: (TM, TN) output tile -- written once, fused epilogue
    acc = jnp.dot(x_ref[...], w_ref[...], preferred_element_type=jnp.float32)
    y = acc + b_ref[...]
    y = y * jax.nn.sigmoid(y)            # SiLU; sigmoid uses the EUP slot
    o_ref[...] = y.astype(o_ref.dtype)


def _pick_tn(n, kdim, in_bytes, vmem_limit):
    """Cout tile: full Cout if the double-buffered weight tile fits ~1/3 of VMEM,
    otherwise a 128-aligned tile (pad Cout only if needed -- weights are cheap)."""
    wbudget = vmem_limit // 3
    if n <= 128 or 2 * kdim * n * in_bytes <= wbudget:
        return n, n
    for tn in (512, 384, 256, 128):
        if n % tn == 0 and 2 * kdim * tn * in_bytes <= wbudget:
            return tn, n
    return 128, _round_up(n, 128)


def _pick_tm(m, kdim, tn, num_n, in_bytes, out_bytes, vmem_limit):
    """Rows per grid step: as large as the VMEM budget allows, charging the
    resident double-buffered weight tile, the bias and the f32 accumulator;
    capped so the grid keeps >= 2 steps (megacore) and MXU-aligned."""
    headroom = 2 << 20
    resident = 2 * kdim * tn * in_bytes + 2 * tn * 4          # weight (x2) + bias
    budget = max(vmem_limit - resident - headroom, 1 << 20)
    per_row = 2 * kdim * in_bytes + 2 * tn * out_bytes + tn * 4  # x(x2) + out(x2) + f32 acc
    tm = budget // per_row
    tm = int(max(8, min(tm, 2048)))
    if num_n < 2:                                             # keep >= 2 total grid steps
        tm = min(tm, max(8, _round_up(_cdiv(m, 2), 8)))
    tm = min(tm, _round_up(m, 8))
    if tm >= 256:
        tm = (tm // 256) * 256                                # MXU-aligned M tile
    else:
        tm = max(8, (tm // 8) * 8)
    return int(tm)


def _gemm_bias_silu(patches, w2d, bias, out_dtype, vmem_limit):
    """patches: (M, K); w2d: (K, Cout); bias: (Cout,). Returns (M, Cout)."""
    m, kdim = patches.shape
    n = w2d.shape[1]
    in_b = patches.dtype.itemsize
    out_b = jnp.dtype(out_dtype).itemsize

    tn, npad = _pick_tn(n, kdim, in_b, vmem_limit)
    if npad != n:                                             # lane-dense Cout (weights only)
        w2d = jnp.pad(w2d, ((0, 0), (0, npad - n)))
        bias = jnp.pad(bias, (0, npad - n))
    num_n = npad // tn
    tm = _pick_tm(m, kdim, tn, num_n, in_b, out_b, vmem_limit)
    grid = (_cdiv(m, tm), num_n)           # no M pad: Pallas masks the last partial block

    out = pl.pallas_call(
        _gemm_bias_silu_kernel,
        out_shape=jax.ShapeDtypeStruct((m, npad), out_dtype),
        grid_spec=pltpu.PrefetchScalarGridSpec(
            num_scalar_prefetch=0,
            grid=grid,
            in_specs=[
                pl.BlockSpec((tm, kdim), lambda i, j: (i, 0)),   # activation tile (resident over j)
                pl.BlockSpec((kdim, tn), lambda i, j: (0, j)),   # weight tile
                pl.BlockSpec((1, tn), lambda i, j: (0, j)),      # bias tile
            ],
            out_specs=pl.BlockSpec((tm, tn), lambda i, j: (i, j)),
        ),
        compiler_params=pltpu.CompilerParams(
            dimension_semantics=("parallel", "parallel"),
            vmem_limit_bytes=vmem_limit,
        ),
    )(patches,
      w2d.astype(patches.dtype),
      bias.reshape(1, npad).astype(jnp.float32))
    return out if npad == n else out[:, :n]


# --------------------------------------------------------------------------
# Path 2: k x k, stride-1 conv without wrapper im2col.  The padded NHWC input
#         stays in HBM (pl.ANY); each grid step DMAs one overlapping row window
#         into VMEM and accumulates k*k shifted-window GEMMs.
# --------------------------------------------------------------------------
def _make_conv_window_kernel(k, d, th, wo):
    def kernel(xp_hbm, w_ref, b_ref, o_ref, xwin, sem):
        b = pl.program_id(0)
        r = pl.program_id(1)
        row0 = r * th                                     # stride 1: th output rows per block
        cp = pltpu.make_async_copy(
            xp_hbm.at[b, pl.ds(row0, xwin.shape[0])], xwin, sem)
        cp.start()
        cp.wait()
        # TODO(synk): cross-step double-buffering of the row window (prefetch next
        # block's window during this block's compute) is not implemented.
        n = o_ref.shape[-1]
        acc = jnp.zeros((th * wo, n), jnp.float32)
        for kh in range(k):
            for kw in range(k):
                patch = xwin[pl.ds(kh * d, th), pl.ds(kw * d, wo), :]
                patch = patch.reshape(th * wo, -1)
                acc = acc + jnp.dot(patch, w_ref[kh, kw],
                                    preferred_element_type=jnp.float32)
        y = acc + b_ref[...]                              # (1, N) broadcasts over (TH*WO, N)
        y = y * jax.nn.sigmoid(y)                         # SiLU
        o_ref[0] = y.reshape(th, wo, n).astype(o_ref.dtype)
    return kernel


def _pick_th(ho, wo, wp, cin, n, k, d, in_b, out_b, batch, vmem_limit):
    headroom = 2 << 20
    resident = 2 * k * k * cin * n * in_b + 2 * n * 4     # weight (x2) + bias
    budget = max(vmem_limit - resident - headroom, 1 << 20)
    per_row = wp * cin * in_b + 2 * wo * n * out_b + wo * n * 4   # window + out(x2) + f32 acc
    const = (d * (k - 1) + 1) * wp * cin * in_b
    th = (budget - const) // per_row
    th = int(max(1, min(th, ho, 256)))
    if batch < 2:                                         # keep >= 2 grid steps for megacore
        th = min(th, max(1, _cdiv(ho, 2)))
    return th


def _conv_window_bias_silu(x_nhwc, w4d, bias, k, p, d, out_dtype, vmem_limit):
    """Stride-1 k x k conv. x_nhwc: (B,H,W,Cin); w4d: (k,k,Cin,Cout); bias: (Cout,)."""
    B, H, W, cin = x_nhwc.shape
    n = w4d.shape[-1]
    ho = H + 2 * p - d * (k - 1)
    wo = W + 2 * p - d * (k - 1)
    wp = W + 2 * p
    in_b = x_nhwc.dtype.itemsize
    out_b = jnp.dtype(out_dtype).itemsize

    th = _pick_th(ho, wo, wp, cin, n, k, d, in_b, out_b, B, vmem_limit)
    nr = _cdiv(ho, th)
    win_rows = th + d * (k - 1)                           # padded-input rows per row block
    rows_needed = (nr - 1) * th + win_rows                # last block never DMAs out of bounds
    bottom = max(rows_needed - (H + p), 0)
    xp = jnp.pad(x_nhwc, ((0, 0), (p, bottom), (p, p), (0, 0)))

    # TODO(synk): no Cout/K tiling on this path yet; very large Cin*Cout*k*k f32
    # weights should be tiled over Cout like the GEMM path.
    kernel = _make_conv_window_kernel(k, d, th, wo)
    out = pl.pallas_call(
        kernel,
        out_shape=jax.ShapeDtypeStruct((B, ho, wo, n), out_dtype),
        grid_spec=pltpu.PrefetchScalarGridSpec(
            num_scalar_prefetch=0,
            grid=(B, nr),
            in_specs=[
                pl.BlockSpec(memory_space=pl.ANY),                       # padded NHWC, manual DMA
                pl.BlockSpec((k, k, cin, n), lambda b, r: (0, 0, 0, 0)),  # folded weight, resident
                pl.BlockSpec((1, n), lambda b, r: (0, 0)),                # folded bias
            ],
            out_specs=pl.BlockSpec((1, th, wo, n), lambda b, r: (b, r, 0, 0)),
            scratch_shapes=[
                pltpu.VMEM((win_rows, wp, cin), x_nhwc.dtype),
                pltpu.SemaphoreType.DMA,
            ],
        ),
        compiler_params=pltpu.CompilerParams(
            dimension_semantics=("parallel", "parallel"),
            vmem_limit_bytes=vmem_limit,
        ),
    )(xp, w4d, bias.reshape(1, n).astype(jnp.float32))
    return out


# --------------------------------------------------------------------------
# Conv.forward:  SiLU(BatchNorm2d(Conv2d(x)))   (NCHW in / NCHW out)
# --------------------------------------------------------------------------
def conv_forward(x_nchw, conv_w, bn, k=1, s=1, p=None, g=1, d=1, mxu_dtype=None):
    """Matches ultralytics Conv.forward with default act (SiLU), inference-mode BN.
    mxu_dtype: optionally cast activations/weights (e.g. jnp.bfloat16) for the MXU."""
    assert g == 1  # TODO(synk): grouped convolution (g > 1) not implemented.
    B, cin, H, W = x_nchw.shape
    cout = conv_w.shape[0]
    p = autopad(k, p, d)
    out_dtype = x_nchw.dtype
    compute_dtype = jnp.dtype(mxu_dtype) if mxu_dtype is not None else x_nchw.dtype
    vmem_limit = _vmem_limit_bytes()

    # Fold inference-mode BatchNorm into the conv weight / bias (f32 folding).
    scale = bn["gamma"] / jnp.sqrt(bn["var"] + bn["eps"])            # (Cout,)
    w_folded = conv_w.astype(jnp.float32) * scale[:, None, None, None]
    b_folded = bn["beta"] - bn["mean"] * scale                       # (Cout,)

    x = jnp.transpose(x_nchw, (0, 2, 3, 1)).astype(compute_dtype)    # NHWC
    ho = (H + 2 * p - d * (k - 1) - 1) // s + 1
    wo = (W + 2 * p - d * (k - 1) - 1) // s + 1
    # (Cout, Cin, kh, kw) -> (kh, kw, Cin, Cout); matches patch channel order.
    w_hwio = jnp.transpose(w_folded, (2, 3, 1, 0)).astype(compute_dtype)

    if k == 1 and p == 0:
        xs = x if s == 1 else x[:, ::s, ::s, :]
        patches = xs.reshape(B * ho * wo, cin)
        out = _gemm_bias_silu(patches, w_hwio.reshape(cin, cout), b_folded,
                              out_dtype, vmem_limit)
        out = out.reshape(B, ho, wo, cout)
    elif s == 1:
        out = _conv_window_bias_silu(x, w_hwio, b_folded, k, p, d,
                                     out_dtype, vmem_limit)
    else:
        # TODO(synk): k>1 with stride>1 still im2cols in the wrapper (k^2 HBM blowup);
        # an in-kernel strided-window path would remove it.
        xp = jnp.pad(x, ((0, 0), (p, p), (p, p), (0, 0)))
        cols = []
        for kh in range(k):
            for kw in range(k):
                oh, ow = kh * d, kw * d
                cols.append(xp[:, oh:oh + (ho - 1) * s + 1:s,
                               ow:ow + (wo - 1) * s + 1:s, :])
        patches = jnp.concatenate(cols, axis=-1).reshape(B * ho * wo, k * k * cin)
        out = _gemm_bias_silu(patches, w_hwio.reshape(k * k * cin, cout), b_folded,
                              out_dtype, vmem_limit)
        out = out.reshape(B, ho, wo, cout)

    return jnp.transpose(out, (0, 3, 1, 2))                          # (B, Cout, Ho, Wo)


# --------------------------------------------------------------------------
# Pure-JAX reference mirroring the PyTorch forward exactly.
# --------------------------------------------------------------------------
def conv_reference(x, conv_w, bn, k=1, s=1, p=None, g=1, d=1):
    p = autopad(k, p, d)
    y = lax.conv_general_dilated(
        x, conv_w, window_strides=(s, s), padding=[(p, p), (p, p)],
        rhs_dilation=(d, d), feature_group_count=g,
        dimension_numbers=("NCHW", "OIHW", "NCHW"))
    scale = bn["gamma"] / jnp.sqrt(bn["var"] + bn["eps"])
    y = (y * scale[None, :, None, None]
         + (bn["beta"] - bn["mean"] * scale)[None, :, None, None])
    return y * jax.nn.sigmoid(y)                                     # SiLU


if __name__ == "__main__":
    key = jax.random.PRNGKey(0)
    kx, kg, kb, km, kv, kw1, kw2, kw3 = jax.random.split(key, 8)

    B, Cin, Cout, H, W = 2, 4, 8, 16, 16
    x = jax.random.normal(kx, (B, Cin, H, W), jnp.float32)

    bn = {
        "gamma": 1.0 + 0.1 * jax.random.normal(kg, (Cout,), jnp.float32),
        "beta": 0.1 * jax.random.normal(kb, (Cout,), jnp.float32),
        "mean": 0.1 * jax.random.normal(km, (Cout,), jnp.float32),
        "var": jax.random.uniform(kv, (Cout,), jnp.float32, minval=0.5, maxval=1.5),
        "eps": 1e-5,
    }

    # Default Conv config (k=1, s=1) plus 3x3 stride-1 and 3x3 stride-2.
    for (k, s, kw) in [(1, 1, kw1), (3, 1, kw2), (3, 2, kw3)]:
        cw = jax.random.normal(kw, (Cout, Cin, k, k), jnp.float32) * 0.2
        out = jax.block_until_ready(conv_forward(x, cw, bn, k=k, s=s))
        ref = jax.block_until_ready(conv_reference(x, cw, bn, k=k, s=s))
        assert out.shape == ref.shape, (k, s, out.shape, ref.shape)
        err = float(jnp.max(jnp.abs(out - ref)))
        # Tolerance covers TPU matmul precision-mode differences (bf16 passes)
        # between the Pallas GEMM and XLA's conv; indexing bugs would be O(1).
        assert err < 2e-2, f"mismatch k={k} s={s} max_abs_err={err}"

    print("KERNEL_OK")
</pallas_src>

<mosaic_0001>
module attributes {stable_mosaic.version = 11 : i64} {
  func.func @_gemm_bias_silu_kernel(%arg0: i32, %arg1: i32, %arg2: memref<256x4xf32, #tpu.memory_space<vmem>>, %arg3: memref<4x8xf32, #tpu.memory_space<vmem>>, %arg4: memref<1x8xf32, #tpu.memory_space<vmem>>, %arg5: memref<256x8xf32, #tpu.memory_space<vmem>>) attributes {dimension_semantics = [#tpu.dimension_semantics<parallel>, #tpu.dimension_semantics<parallel>], iteration_bounds = array<i64: 2, 1>, scalar_prefetch = 0 : i64, scratch_operands = 0 : i64, tpu.core_type = #tpu.core_type<tc>, window_params = [{transform_indices = @transform_0, window_bounds = array<i64: 256, 4>}, {transform_indices = @transform_1, window_bounds = array<i64: 4, 8>}, {transform_indices = @transform_2, window_bounds = array<i64: 1, 8>}, {transform_indices = @transform_3, window_bounds = array<i64: 256, 8>}]} {
    %c0 = arith.constant 0 : index
    %c0_0 = arith.constant 0 : index
    %0 = vector.load %arg2[%c0, %c0_0] : memref<256x4xf32, #tpu.memory_space<vmem>>, vector<256x4xf32>
    %c0_1 = arith.constant 0 : index
    %c0_2 = arith.constant 0 : index
    %1 = vector.load %arg3[%c0_1, %c0_2] : memref<4x8xf32, #tpu.memory_space<vmem>>, vector<4x8xf32>
    %cst = arith.constant dense<0.000000e+00> : vector<256x8xf32>
    %2 = tpu.matmul %0, %1, %cst {dimension_numbers = #tpu.dot_dimension_numbers<[1], [0], [0], [1], [0, 0, 1, 1], [], []>} : vector<256x4xf32>, vector<4x8xf32>, vector<256x8xf32> -> vector<256x8xf32>
    %c0_3 = arith.constant 0 : index
    %c0_4 = arith.constant 0 : index
    %3 = vector.load %arg4[%c0_3, %c0_4] : memref<1x8xf32, #tpu.memory_space<vmem>>, vector<1x8xf32>
    %4 = vector.broadcast %3 : vector<1x8xf32> to vector<256x8xf32>
    %5 = arith.addf %2, %4 : vector<256x8xf32>
    %6 = arith.negf %5 : vector<256x8xf32>
    %7 = math.exp %6 : vector<256x8xf32>
    %cst_5 = arith.constant 1.000000e+00 : f32
    %8 = vector.broadcast %cst_5 : f32 to vector<256x8xf32>
    %9 = arith.addf %8, %7 : vector<256x8xf32>
    %10 = arith.divf %8, %9 : vector<256x8xf32>
    %11 = arith.mulf %5, %10 : vector<256x8xf32>
    %c0_6 = arith.constant 0 : index
    %c0_7 = arith.constant 0 : index
    %12 = vector.load %arg5[%c0_6, %c0_7] : memref<256x8xf32, #tpu.memory_space<vmem>>, vector<256x8xf32>
    tpu.vector_store %arg5[%c0_6, %c0_7], %11 {strides = array<i32>} : memref<256x8xf32, #tpu.memory_space<vmem>>, vector<256x8xf32>,
    return
  }
  func.func @transform_0(%arg0: i32, %arg1: i32) -> (i32, i32) {
    %c0_i32 = arith.constant 0 : i32
    %c0_i32_0 = arith.constant 0 : i32
    return %arg0, %c0_i32 : i32, i32
  }
  func.func @transform_1(%arg0: i32, %arg1: i32) -> (i32, i32) {
    %c0_i32 = arith.constant 0 : i32
    %c0_i32_0 = arith.constant 0 : i32
    return %c0_i32, %arg1 : i32, i32
  }
  func.func @transform_2(%arg0: i32, %arg1: i32) -> (i32, i32) {
    %c0_i32 = arith.constant 0 : i32
    %c0_i32_0 = arith.constant 0 : i32
    return %c0_i32, %arg1 : i32, i32
  }
  func.func @transform_3(%arg0: i32, %arg1: i32) -> (i32, i32) {
    %c0_i32 = arith.constant 0 : i32
    return %arg0, %arg1 : i32, i32
  }
}

</mosaic_0001>

<llo_original>
// kernel: tpu_custom_call.1
$region0: #{tpu_custom_call.1}
  #allocation0 [shape = 'u32[]', space=smem, size = 0x4, offset = 0x4, fixed_abs, tag = 'smem constant byte address 0x4 - core index']
  #allocation1 [shape = 'u32[144,128]{1,0:T(1,128)}', space=vmem, size = 0x12000, scoped, tag = 'internal scratch']
  %s0 = inlined_call_operand.vmem [shape: f32[512,4], index: 0, kind: input, shape index: {}]
  %s1 = inlined_call_operand.vmem [shape: f32[4,8], index: 1, kind: input, shape index: {}]
  %s2 = inlined_call_operand.vmem [shape: f32[1,8], index: 2, kind: input, shape index: {}]
  %s3 = inlined_call_operand.vmem [shape: f32[512,8], index: 3, kind: output, shape index: {}]
  %s4 = sld [smem:[#allocation0]]
  $region45: #{tpu_custom_call.1} parent=0
    _
  %s6 = ssub.s32 1, %s4
  %s7 = scalar_select 0, %s6, %s4
  loop: start=0, step=1, limit=4
  $region2: #{tpu_custom_call.1} parent=0 // loop_pre_header
    _
  $region3: #{tpu_custom_call.1} parent=0 // loop_header
    %s9 = sphi 0, %s13
    %p10 = scmp.ge.s32.totalorder %s9, 4
    %s16 = sphi 0, %s28
    %s17 = sphi 0, %s24
    %s18 = sphi 0, %s16
    %s19 = sphi 0, %s17
    %s20 = sphi 0, %s18
    %s21 = sphi 0, %s19
    %s31 = sphi 0, %s33
    %s34 = sphi 0, %s31
    %s35 = sphi 0, %s34
    %s51 = sphi 0, %s35
    %s57 = sphi 0, %s59
    %s60 = sphi 0, %s57
    %s61 = sphi 0, %s60
    %s77 = sphi 0, %s61
    %s83 = sphi 0, %s85
    %s86 = sphi 0, %s83
    %s87 = sphi 0, %s86
    %s103 = sphi 0, %s87
    %s111 = sphi 0, %s113
    %s114 = sphi 0, %s111
    %s115 = sphi 0, %s114
    %s131 = sphi 0, %s115
  $region4: #{tpu_custom_call.1} parent=0 // loop_header_branch
    %12 = sbr.rel (%p10) target = $region8
  $region5: #{tpu_custom_call.1} parent=0 // loop_body
    %s14 = ssub.s32 %s9, 1
    %s15 = ssub.s32 %s9, 2
    %s22 = sadd.s32 1, %s17
    %p23 = scmp.ge.s32.totalorder %s22, 1
    %s24 = scalar_select %p23, 0, %s22
    %s25 = sadd.s32 1, %s16
    %s26 = scalar_select %p23, %s25, %s16
    %p27 = scmp.ge.s32.totalorder %s26, 2
    %s28 = scalar_select %p27, 0, %s26
    %s29 = ssub.s32 %s16, %s28
    %p30 = scmp.eq.s32.totalorder %s29, 0
    %s32 = sadd.s32 %s31, 1
    %s33 = scalar_select %p30, %s31, %s32
    %p36 = pneg %p30
    %p37 = scmp.eq.s32.totalorder %s9, 1
    %p38 = por %p36, %p37
    %p39 = scmp.ne.s32.totalorder %s31, %s34
    %p40 = scmp.eq.s32.totalorder %s9, 0
    %p41 = por %p39, %p40
    %p42 = scmp.ne.s32.totalorder %s31, %s34
    %p43 = scmp.eq.s32.totalorder %s14, 1
    %p44 = por %p42, %p43
    %p45 = scmp.ne.s32.totalorder %s34, %s35
    %p46 = scmp.eq.s32.totalorder %s14, 0
    %p47 = por %p45, %p46
    %p48 = scmp.ne.s32.totalorder %s34, %s35
    %p49 = scmp.eq.s32.totalorder %s15, 1
    %p50 = por %p48, %p49
    %p52 = scmp.ne.s32.totalorder %s35, %s51
    %p53 = scmp.eq.s32.totalorder %s15, 0
    %p54 = por %p52, %p53
    %s55 = ssub.s32 %s17, %s24
    %p56 = scmp.eq.s32.totalorder %s55, 0
    %s58 = sadd.s32 %s57, 1
    %s59 = scalar_select %p56, %s57, %s58
    %p62 = pneg %p56
    %p63 = scmp.eq.s32.totalorder %s9, 1
    %p64 = por %p62, %p63
    %p65 = scmp.ne.s32.totalorder %s57, %s60
    %p66 = scmp.eq.s32.totalorder %s9, 0
    %p67 = por %p65, %p66
    %p68 = scmp.ne.s32.totalorder %s57, %s60
    %p69 = scmp.eq.s32.totalorder %s14, 1
    %p70 = por %p68, %p69
    %p71 = scmp.ne.s32.totalorder %s60, %s61
    %p72 = scmp.eq.s32.totalorder %s14, 0
    %p73 = por %p71, %p72
    %p74 = scmp.ne.s32.totalorder %s60, %s61
    %p75 = scmp.eq.s32.totalorder %s15, 1
    %p76 = por %p74, %p75
    %p78 = scmp.ne.s32.totalorder %s61, %s77
    %p79 = scmp.eq.s32.totalorder %s15, 0
    %p80 = por %p78, %p79
    %s81 = ssub.s32 %s17, %s24
    %p82 = scmp.eq.s32.totalorder %s81, 0
    %s84 = sadd.s32 %s83, 1
    %s85 = scalar_select %p82, %s83, %s84
    %p88 = pneg %p82
    %p89 = scmp.eq.s32.totalorder %s9, 1
    %p90 = por %p88, %p89
    %p91 = scmp.ne.s32.totalorder %s83, %s86
    %p92 = scmp.eq.s32.totalorder %s9, 0
    %p93 = por %p91, %p92
    %p94 = scmp.ne.s32.totalorder %s83, %s86
    %p95 = scmp.eq.s32.totalorder %s14, 1
    %p96 = por %p94, %p95
    %p97 = scmp.ne.s32.totalorder %s86, %s87
    %p98 = scmp.eq.s32.totalorder %s14, 0
    %p99 = por %p97, %p98
    %p100 = scmp.ne.s32.totalorder %s86, %s87
    %p101 = scmp.eq.s32.totalorder %s15, 1
    %p102 = por %p100, %p101
    %p104 = scmp.ne.s32.totalorder %s87, %s103
    %p105 = scmp.eq.s32.totalorder %s15, 0
    %p106 = por %p104, %p105
    %s107 = ssub.s32 %s16, %s28
    %s108 = ssub.s32 %s17, %s24
    %s109 = sor.u32 %s107, %s108
    %p110 = scmp.eq.s32.totalorder %s109, 0
    %s112 = sadd.s32 %s111, 1
    %s113 = scalar_select %p110, %s111, %s112
    %p116 = pneg %p110
    %p117 = scmp.eq.s32.totalorder %s9, 1
    %p118 = por %p116, %p117
    %p119 = scmp.ne.s32.totalorder %s111, %s114
    %p120 = scmp.eq.s32.totalorder %s9, 0
    %p121 = por %p119, %p120
    %p122 = scmp.ne.s32.totalorder %s111, %s114
    %p123 = scmp.eq.s32.totalorder %s14, 1
    %p124 = por %p122, %p123
    %p125 = scmp.ne.s32.totalorder %s114, %s115
    %p126 = scmp.eq.s32.totalorder %s14, 0
    %p127 = por %p125, %p126
    %p128 = scmp.ne.s32.totalorder %s114, %s115
    %p129 = scmp.eq.s32.totalorder %s15, 1
    %p130 = por %p128, %p129
    %p132 = scmp.ne.s32.totalorder %s115, %s131
    %p133 = scmp.eq.s32.totalorder %s15, 0
    %p134 = por %p132, %p133
    %p135 = scmp.le.s32.totalorder 1, %s9
    %p136 = scmp.lt.s32.totalorder %s9, 3
    %p137 = pnand %p135, %p136
    %p138 = pneg %p137
    // Predicated region
    $region9: #{tpu_custom_call.1} parent=5 // pred_check
      _
    $region10: #{tpu_custom_call.1} parent=5 // pred_check_branch
      %140 = sbr.rel (%p137) target = $region12
    $region11: #{tpu_custom_call.1} parent=5 // pred_region
      %s141 = ssub.s32 %s9, 1
      // Predicated region
      $region13: #{tpu_custom_call.1} parent=11 // pred_check
        %p142 = pneg %p73
      $region14: #{tpu_custom_call.1} parent=11 // pred_check_branch
        %144 = sbr.rel (%p142) target = $region16
      $region15: #{tpu_custom_call.1} parent=11 // pred_region
        %p145 = scmp.lt.s32.totalorder %s19, 0
        %s146 = scalar_select %p145, %s19, 0
        %s147 = smul.addr %s146, 4
        %s148 = scalar_lea.vmem %s1, %s147
      $region16: #{tpu_custom_call.1} parent=11 // pred_fallthru
        _
      // Predicated region
      $region17: #{tpu_custom_call.1} parent=11 // pred_check
        %p149 = pneg %p99
      $region18: #{tpu_custom_call.1} parent=11 // pred_check_branch
        %151 = sbr.rel (%p149) target = $region20
      $region19: #{tpu_custom_call.1} parent=11 // pred_region
        %p152 = scmp.lt.s32.totalorder %s19, 0
        %s153 = scalar_select %p152, %s19, 0
        %s154 = scalar_lea.vmem %s2, %s153
      $region20: #{tpu_custom_call.1} parent=11 // pred_fallthru
        _
    $region12: #{tpu_custom_call.1} parent=5 // pred_fallthru
      _
    %p155 = scmp.lt.s32.totalorder %s9, 2
    // Predicated region
    $region21: #{tpu_custom_call.1} parent=5 // pred_check
      %p156 = pneg %p155
    $region22: #{tpu_custom_call.1} parent=5 // pred_check_branch
      %158 = sbr.rel (%p156) target = $region24
    $region23: #{tpu_custom_call.1} parent=5 // pred_region
      // Predicated region
      $region25: #{tpu_custom_call.1} parent=23 // pred_check
        %p159 = pneg %p41
      $region26: #{tpu_custom_call.1} parent=23 // pred_check_branch
        %161 = sbr.rel (%p159) target = $region28
      $region27: #{tpu_custom_call.1} parent=23 // pred_region
        %s162 = smul.u32 32, %s16
        %p163 = scmp.lt.s32.totalorder %s162, 63
        %s164 = scalar_select %p163, %s162, 63
        %s165 = smul.addr %s164, 8
        %s166 = scalar_lea.vmem %s0, %s165
        %s167 = smul.u32 32, %s16
      $region28: #{tpu_custom_call.1} parent=23 // pred_fallthru
        _
    $region24: #{tpu_custom_call.1} parent=5 // pred_fallthru
      _
    %p168 = scmp.le.s32.totalorder 1, %s9
    %p169 = scmp.lt.s32.totalorder %s9, 3
    %p170 = pnand %p168, %p169
    %p171 = pneg %p170
    // Predicated region
    $region29: #{tpu_custom_call.1} parent=5 // pred_check
      _
    $region30: #{tpu_custom_call.1} parent=5 // pred_check_branch
      %173 = sbr.rel (%p170) target = $region32
    $region31: #{tpu_custom_call.1} parent=5 // pred_region
      %s174 = ssub.s32 %s9, 1
      %s175 = smul.u32 32, %s18
      %p176 = scmp.lt.s32.totalorder %s175, 63
      %s177 = scalar_select %p176, %s175, 63
      %s178 = smul.addr %s177, 8
      %s179 = scalar_lea.vmem %s0, %s178
      %p180 = pneg %p47
      %p181 = pneg %p44
      %p182 = scmp.lt.s32.totalorder %s19, 0
      %s183 = scalar_select %p182, %s19, 0
      %s184 = smul.addr %s183, 4
      %s185 = scalar_lea.vmem %s1, %s184
      %p186 = pneg %p73
      %p187 = pneg %p70
      %p188 = scmp.lt.s32.totalorder %s19, 0
      %s189 = scalar_select %p188, %s19, 0
      %s190 = scalar_lea.vmem %s2, %s189
      %p191 = pneg %p99
      %p192 = pneg %p96
      %p193 = pneg %p127
      %p194 = pneg %p124
      %s195 = smul.u32 32, %s18
      %p196 = scmp.lt.s32.totalorder %s195, 63
      %s197 = scalar_select %p196, %s195, 63
      %p198 = scmp.lt.s32.totalorder %s19, 0
      %s199 = scalar_select %p198, %s19, 0
      %s200 = sadd.s32 %s199, %s197
      %s201 = smul.addr %s200, 8
      %s202 = scalar_lea.vmem %s3, %s201
      %s203 = smul.u32 32, %s18
      %p204 = scmp.lt.s32.totalorder %s203, 63
      %s205 = scalar_select %p204, %s203, 63
      %s206 = smul.addr %s205, 8
      %s207 = scalar_lea.vmem %s0, %s206
      %s208 = smul.u32 32, %s18
      %p209 = scmp.lt.s32.totalorder %s19, 0
      %s210 = scalar_select %p209, %s19, 0
      %s211 = smul.addr %s210, 4
      %s212 = scalar_lea.vmem %s1, %s211
      %p213 = scmp.lt.s32.totalorder %s19, 0
      %s214 = scalar_select %p213, %s19, 0
      %s215 = scalar_lea.vmem %s2, %s214
      %s216 = smul.u32 32, %s18
      %p217 = scmp.lt.s32.totalorder %s216, 63
      %s218 = scalar_select %p217, %s216, 63
      %p219 = scmp.lt.s32.totalorder %s19, 0
      %s220 = scalar_select %p219, %s19, 0
      %s221 = sadd.s32 %s220, %s218
      %s222 = smul.addr %s221, 8
      %s223 = scalar_lea.vmem %s3, %s222
      %s224 = smul.u32 32, %s18
      %v225 = vld [vmem:[%s207] sm:$0xff]
      %v226 = vld [vmem:[%s207 + $0x8] sm:$0xff]
      %v227 = vld [vmem:[%s207 + $0x10] sm:$0xff]
      %v228 = vld [vmem:[%s207 + $0x18] sm:$0xff]
      %v229 = vld [vmem:[%s207 + $0x20] sm:$0xff]
      %v230 = vld [vmem:[%s207 + $0x28] sm:$0xff]
      %v231 = vld [vmem:[%s207 + $0x30] sm:$0xff]
      %v232 = vld [vmem:[%s207 + $0x38] sm:$0xff]
      %v233 = vld [vmem:[%s207 + $0x40] sm:$0xff]
      %v234 = vld [vmem:[%s207 + $0x48] sm:$0xff]
      %v235 = vld [vmem:[%s207 + $0x50] sm:$0xff]
      %v236 = vld [vmem:[%s207 + $0x58] sm:$0xff]
      %v237 = vld [vmem:[%s207 + $0x60] sm:$0xff]
      %v238 = vld [vmem:[%s207 + $0x68] sm:$0xff]
      %v239 = vld [vmem:[%s207 + $0x70] sm:$0xff]
      %v240 = vld [vmem:[%s207 + $0x78] sm:$0xff]
      %v241 = vld [vmem:[%s207 + $0x80] sm:$0xff]
      %v242 = vld [vmem:[%s207 + $0x88] sm:$0xff]
      %v243 = vld [vmem:[%s207 + $0x90] sm:$0xff]
      %v244 = vld [vmem:[%s207 + $0x98] sm:$0xff]
      %v245 = vld [vmem:[%s207 + $0xa0] sm:$0xff]
      %v246 = vld [vmem:[%s207 + $0xa8] sm:$0xff]
      %v247 = vld [vmem:[%s207 + $0xb0] sm:$0xff]
      %v248 = vld [vmem:[%s207 + $0xb8] sm:$0xff]
      %v249 = vld [vmem:[%s207 + $0xc0] sm:$0xff]
      %v250 = vld [vmem:[%s207 + $0xc8] sm:$0xff]
      %v251 = vld [vmem:[%s207 + $0xd0] sm:$0xff]
      %v252 = vld [vmem:[%s207 + $0xd8] sm:$0xff]
      %v253 = vld [vmem:[%s207 + $0xe0] sm:$0xff]
      %v254 = vld [vmem:[%s207 + $0xe8] sm:$0xff]
      %v255 = vld [vmem:[%s207 + $0xf0] sm:$0xff]
      %v256 = vld [vmem:[%s207 + $0xf8] sm:$0xff]
      %v257 = vld [vmem:[%s212] sm:$0xf]
      %v258 = vld [vmem:[%s215] sm:$0x1]
      %v260 = vlaneseq
      %v261 = vshrl.u32 %v260, 7
      %v262 = vsub.s32 0, %v261
      %v263 = vrot.slane %v258, %v262
      %vm265 = vcmask 31744
      %v267 = vsel %vm265, %v225, 0
      %v270 = vsel %vm265, %v226, 0
      %v273 = vsel %vm265, %v227, 0
      %v276 = vsel %vm265, %v228, 0
      %v279 = vsel %vm265, %v229, 0
      %v282 = vsel %vm265, %v230, 0
      %v285 = vsel %vm265, %v231, 0
      %v288 = vsel %vm265, %v232, 0
      %v291 = vsel %vm265, %v233, 0
      %v294 = vsel %vm265, %v234, 0
      %v297 = vsel %vm265, %v235, 0
      %v300 = vsel %vm265, %v236, 0
      %v303 = vsel %vm265, %v237, 0
      %v306 = vsel %vm265, %v238, 0
      %v309 = vsel %vm265, %v239, 0
      %v312 = vsel %vm265, %v240, 0
      %v315 = vsel %vm265, %v241, 0
      %v318 = vsel %vm265, %v242, 0
      %v321 = vsel %vm265, %v243, 0
      %v324 = vsel %vm265, %v244, 0
      %v327 = vsel %vm265, %v245, 0
      %v330 = vsel %vm265, %v246, 0
      %v333 = vsel %vm265, %v247, 0
      %v336 = vsel %vm265, %v248, 0
      %v339 = vsel %vm265, %v249, 0
      %v342 = vsel %vm265, %v250, 0
      %v345 = vsel %vm265, %v251, 0
      %v348 = vsel %vm265, %v252, 0
      %v351 = vsel %vm265, %v253, 0
      %v354 = vsel %vm265, %v254, 0
      %v357 = vsel %vm265, %v255, 0
      %v360 = vsel %vm265, %v256, 0
      %vm362 = vcmask 1043456
      %v364 = vsel %vm362, %v257, 0
      %366 = vmatprep.subr.mxu0 0.0
      %367 = vmatpush1.msra.mxu0 %v364
      %368 = vmatprep.subr.mxu0 0.0
      %369 = vmatpush1.msra.mxu0 0.0
      %370 = vmatprep.subr.mxu0 0.0
      %371 = vmatpush1.msra.mxu0 0.0
      %372 = vmatprep.subr.mxu0 0.0
      %373 = vmatpush1.msra.mxu0 0.0
      %374 = vmatprep.subr.mxu0 0.0
      %375 = vmatpush1.msra.mxu0 0.0
      %376 = vmatprep.subr.mxu0 0.0
      %377 = vmatpush1.msra.mxu0 0.0
      %378 = vmatprep.subr.mxu0 0.0
      %379 = vmatpush1.msra.mxu0 0.0
      %380 = vmatprep.subr.mxu0 0.0
      %381 = vmatpush1.msra.mxu0 0.0
      %382 = vmatprep.subr.mxu0 0.0
      %383 = vmatpush1.msra.mxu0 0.0
      %384 = vmatprep.subr.mxu0 0.0
      %385 = vmatpush1.msra.mxu0 0.0
      %386 = vmatprep.subr.mxu0 0.0
      %387 = vmatpush1.msra.mxu0 0.0
      %388 = vmatprep.subr.mxu0 0.0
      %389 = vmatpush1.msra.mxu0 0.0
      %390 = vmatprep.subr.mxu0 0.0
      %391 = vmatpush1.msra.mxu0 0.0
      %392 = vmatprep.subr.mxu0 0.0
      %393 = vmatpush1.msra.mxu0 0.0
      %394 = vmatprep.subr.mxu0 0.0
      %395 = vmatpush1.msra.mxu0 0.0
      %396 = vmatprep.subr.mxu0 0.0
      %397 = vmatpush1.msra.mxu0 0.0
      %398 = vmatprep.subr.mxu0 0.0
      %399 = vmatpush1.msra.mxu0 0.0
      %400 = vmatprep.subr.mxu0 0.0
      %401 = vmatpush1.msra.mxu0 0.0
      %402 = vmatprep.subr.mxu0 0.0
      %403 = vmatpush1.msra.mxu0 0.0
      %404 = vmatprep.subr.mxu0 0.0
      %405 = vmatpush1.msra.mxu0 0.0
      %406 = vmatprep.subr.mxu0 0.0
      %407 = vmatpush1.msra.mxu0 0.0
      %408 = vmatprep.subr.mxu0 0.0
      %409 = vmatpush1.msra.mxu0 0.0
      %410 = vmatprep.subr.mxu0 0.0
      %411 = vmatpush1.msra.mxu0 0.0
      %412 = vmatprep.subr.mxu0 0.0
      %413 = vmatpush1.msra.mxu0 0.0
      %414 = vmatprep.subr.mxu0 0.0
      %415 = vmatpush1.msra.mxu0 0.0
      %416 = vmatprep.subr.mxu0 0.0
      %417 = vmatpush1.msra.mxu0 0.0
      %418 = vmatprep.subr.mxu0 0.0
      %419 = vmatpush1.msra.mxu0 0.0
      %420 = vmatprep.subr.mxu0 0.0
      %421 = vmatpush1.msra.mxu0 0.0
      %422 = vmatprep.subr.mxu0 0.0
      %423 = vmatpush1.msra.mxu0 0.0
      %424 = vmatprep.subr.mxu0 0.0
      %425 = vmatpush1.msra.mxu0 0.0
      %426 = vmatprep.subr.mxu0 0.0
      %427 = vmatpush1.msra.mxu0 0.0
      %428 = vmatprep.subr.mxu0 0.0
      %429 = vmatpush1.msra.mxu0 0.0
      %430 = vmatprep.mubr.f32.mxu0 0.0
      %431 = vmatmul.mubr.f32.gmra.mrb[0].mxu0 %v267
      %v432 = vpop.f32.mrb[0].mxu0
      %v433 = vadd.f32 %v263, %v432
      %v434 = vpop.f32.mrb[0].mxu0
      %435 = vmatprep.mubr.f32.mxu0 0.0
      %436 = vmatmul.mubr.f32.gmra.mrb[0].mxu0 %v270
      %v437 = vpop.f32.mrb[0].mxu0
      %v438 = vadd.f32 %v263, %v437
      %v439 = vpop.f32.mrb[0].mxu0
      %440 = vmatprep.mubr.f32.mxu0 0.0
      %441 = vmatmul.mubr.f32.gmra.mrb[0].mxu0 %v273
      %v442 = vpop.f32.mrb[0].mxu0
      %v443 = vadd.f32 %v263, %v442
      %v444 = vpop.f32.mrb[0].mxu0
      %445 = vmatprep.mubr.f32.mxu0 0.0
      %446 = vmatmul.mubr.f32.gmra.mrb[0].mxu0 %v276
      %v447 = vpop.f32.mrb[0].mxu0
      %v448 = vadd.f32 %v263, %v447
      %v449 = vpop.f32.mrb[0].mxu0
      %450 = vmatprep.mubr.f32.mxu0 0.0
      %451 = vmatmul.mubr.f32.gmra.mrb[0].mxu0 %v279
      %v452 = vpop.f32.mrb[0].mxu0
      %v453 = vadd.f32 %v263, %v452
      %v454 = vpop.f32.mrb[0].mxu0
      %455 = vmatprep.mubr.f32.mxu0 0.0
      %456 = vmatmul.mubr.f32.gmra.mrb[0].mxu0 %v282
      %v457 = vpop.f32.mrb[0].mxu0
      %v458 = vadd.f32 %v263, %v457
      %v459 = vpop.f32.mrb[0].mxu0
      %460 = vmatprep.mubr.f32.mxu0 0.0
      %461 = vmatmul.mubr.f32.gmra.mrb[0].mxu0 %v285
      %v462 = vpop.f32.mrb[0].mxu0
      %v463 = vadd.f32 %v263, %v462
      %v464 = vpop.f32.mrb[0].mxu0
      %465 = vmatprep.mubr.f32.mxu0 0.0
      %466 = vmatmul.mubr.f32.gmra.mrb[0].mxu0 %v288
      %v467 = vpop.f32.mrb[0].mxu0
      %v468 = vadd.f32 %v263, %v467
      %v469 = vpop.f32.mrb[0].mxu0
      %470 = vmatprep.mubr.f32.mxu0 0.0
      %471 = vmatmul.mubr.f32.gmra.mrb[0].mxu0 %v291
      %v472 = vpop.f32.mrb[0].mxu0
      %v473 = vadd.f32 %v263, %v472
      %v474 = vpop.f32.mrb[0].mxu0
      %475 = vmatprep.mubr.f32.mxu0 0.0
      %476 = vmatmul.mubr.f32.gmra.mrb[0].mxu0 %v294
      %v477 = vpop.f32.mrb[0].mxu0
      %v478 = vadd.f32 %v263, %v477
      %v479 = vpop.f32.mrb[0].mxu0
      %480 = vmatprep.mubr.f32.mxu0 0.0
      %481 = vmatmul.mubr.f32.gmra.mrb[0].mxu0 %v297
      %v482 = vpop.f32.mrb[0].mxu0
      %v483 = vadd.f32 %v263, %v482
      %v484 = vpop.f32.mrb[0].mxu0
      %485 = vmatprep.mubr.f32.mxu0 0.0
      %486 = vmatmul.mubr.f32.gmra.mrb[0].mxu0 %v300
      %v487 = vpop.f32.mrb[0].mxu0
      %v488 = vadd.f32 %v263, %v487
      %v489 = vpop.f32.mrb[0].mxu0
      %490 = vmatprep.mubr.f32.mxu0 0.0
      %491 = vmatmul.mubr.f32.gmra.mrb[0].mxu0 %v303
      %v492 = vpop.f32.mrb[0].mxu0
      %v493 = vadd.f32 %v263, %v492
      %v494 = vpop.f32.mrb[0].mxu0
      %495 = vmatprep.mubr.f32.mxu0 0.0
      %496 = vmatmul.mubr.f32.gmra.mrb[0].mxu0 %v306
      %v497 = vpop.f32.mrb[0].mxu0
      %v498 = vadd.f32 %v263, %v497
      %v499 = vpop.f32.mrb[0].mxu0
      %500 = vmatprep.mubr.f32.mxu0 0.0
      %501 = vmatmul.mubr.f32.gmra.mrb[0].mxu0 %v309
      %v502 = vpop.f32.mrb[0].mxu0
      %v503 = vadd.f32 %v263, %v502
      %v504 = vpop.f32.mrb[0].mxu0
      %505 = vmatprep.mubr.f32.mxu0 0.0
      %506 = vmatmul.mubr.f32.gmra.mrb[0].mxu0 %v312
      %v507 = vpop.f32.mrb[0].mxu0
      %v508 = vadd.f32 %v263, %v507
      %v509 = vpop.f32.mrb[0].mxu0
      %510 = vmatprep.mubr.f32.mxu0 0.0
      %511 = vmatmul.mubr.f32.gmra.mrb[0].mxu0 %v315
      %v512 = vpop.f32.mrb[0].mxu0
      %v513 = vadd.f32 %v263, %v512
      %v514 = vpop.f32.mrb[0].mxu0
      %515 = vmatprep.mubr.f32.mxu0 0.0
      %516 = vmatmul.mubr.f32.gmra.mrb[0].mxu0 %v318
      %v517 = vpop.f32.mrb[0].mxu0
      %v518 = vadd.f32 %v263, %v517
      %v519 = vpop.f32.mrb[0].mxu0
      %520 = vmatprep.mubr.f32.mxu0 0.0
      %521 = vmatmul.mubr.f32.gmra.mrb[0].mxu0 %v321
      %v522 = vpop.f32.mrb[0].mxu0
      %v523 = vadd.f32 %v263, %v522
      %v524 = vpop.f32.mrb[0].mxu0
      %525 = vmatprep.mubr.f32.mxu0 0.0
      %526 = vmatmul.mubr.f32.gmra.mrb[0].mxu0 %v324
      %v527 = vpop.f32.mrb[0].mxu0
      %v528 = vadd.f32 %v263, %v527
      %v529 = vpop.f32.mrb[0].mxu0
      %530 = vmatprep.mubr.f32.mxu0 0.0
      %531 = vmatmul.mubr.f32.gmra.mrb[0].mxu0 %v327
      %v532 = vpop.f32.mrb[0].mxu0
      %v533 = vadd.f32 %v263, %v532
      %v534 = vpop.f32.mrb[0].mxu0
      %535 = vmatprep.mubr.f32.mxu0 0.0
      %536 = vmatmul.mubr.f32.gmra.mrb[0].mxu0 %v330
      %v537 = vpop.f32.mrb[0].mxu0
      %v538 = vadd.f32 %v263, %v537
      %v539 = vpop.f32.mrb[0].mxu0
      %540 = vmatprep.mubr.f32.mxu0 0.0
      %541 = vmatmul.mubr.f32.gmra.mrb[0].mxu0 %v333
      %v542 = vpop.f32.mrb[0].mxu0
      %v543 = vadd.f32 %v263, %v542
      %v544 = vpop.f32.mrb[0].mxu0
      %545 = vmatprep.mubr.f32.mxu0 0.0
      %546 = vmatmul.mubr.f32.gmra.mrb[0].mxu0 %v336
      %v547 = vpop.f32.mrb[0].mxu0
      %v548 = vadd.f32 %v263, %v547
      %v549 = vpop.f32.mrb[0].mxu0
      %550 = vmatprep.mubr.f32.mxu0 0.0
      %551 = vmatmul.mubr.f32.gmra.mrb[0].mxu0 %v339
      %v552 = vpop.f32.mrb[0].mxu0
      %v553 = vadd.f32 %v263, %v552
      %v554 = vpop.f32.mrb[0].mxu0
      %555 = vmatprep.mubr.f32.mxu0 0.0
      %556 = vmatmul.mubr.f32.gmra.mrb[0].mxu0 %v342
      %v557 = vpop.f32.mrb[0].mxu0
      %v558 = vadd.f32 %v263, %v557
      %v559 = vpop.f32.mrb[0].mxu0
      %560 = vmatprep.mubr.f32.mxu0 0.0
      %561 = vmatmul.mubr.f32.gmra.mrb[0].mxu0 %v345
      %v562 = vpop.f32.mrb[0].mxu0
      %v563 = vadd.f32 %v263, %v562
      %v564 = vpop.f32.mrb[0].mxu0
      %565 = vmatprep.mubr.f32.mxu0 0.0
      %566 = vmatmul.mubr.f32.gmra.mrb[0].mxu0 %v348
      %v567 = vpop.f32.mrb[0].mxu0
      %v568 = vadd.f32 %v263, %v567
      %v569 = vpop.f32.mrb[0].mxu0
      %570 = vmatprep.mubr.f32.mxu0 0.0
      %571 = vmatmul.mubr.f32.gmra.mrb[0].mxu0 %v351
      %v572 = vpop.f32.mrb[0].mxu0
      %v573 = vadd.f32 %v263, %v572
      %v574 = vpop.f32.mrb[0].mxu0
      %575 = vmatprep.mubr.f32.mxu0 0.0
      %576 = vmatmul.mubr.f32.gmra.mrb[0].mxu0 %v354
      %v577 = vpop.f32.mrb[0].mxu0
      %v578 = vadd.f32 %v263, %v577
      %v579 = vpop.f32.mrb[0].mxu0
      %580 = vmatprep.mubr.f32.mxu0 0.0
      %581 = vmatmul.mubr.f32.gmra.mrb[0].mxu0 %v357
      %v582 = vpop.f32.mrb[0].mxu0
      %v583 = vadd.f32 %v263, %v582
      %v584 = vpop.f32.mrb[0].mxu0
      %585 = vmatprep.mubr.f32.mxu0 0.0
      %586 = vmatmul.mubr.f32.gmra.mrb[0].mxu0 %v360
      %v587 = vpop.f32.mrb[0].mxu0
      %v588 = vadd.f32 %v263, %v587
      %v589 = vpop.f32.mrb[0].mxu0
      %590 = vdwg.mxu0
      %v591 = vxor.u32 %v433, 2147483648
      %v592 = vxor.u32 %v438, 2147483648
      %v593 = vxor.u32 %v443, 2147483648
      %v594 = vxor.u32 %v448, 2147483648
      %v595 = vxor.u32 %v453, 2147483648
      %v596 = vxor.u32 %v458, 2147483648
      %v597 = vxor.u32 %v463, 2147483648
      %v598 = vxor.u32 %v468, 2147483648
      %v599 = vxor.u32 %v473, 2147483648
      %v600 = vxor.u32 %v478, 2147483648
      %v601 = vxor.u32 %v483, 2147483648
      %v602 = vxor.u32 %v488, 2147483648
      %v603 = vxor.u32 %v493, 2147483648
      %v604 = vxor.u32 %v498, 2147483648
      %v605 = vxor.u32 %v503, 2147483648
      %v606 = vxor.u32 %v508, 2147483648
      %v607 = vxor.u32 %v513, 2147483648
      %v608 = vxor.u32 %v518, 2147483648
      %v609 = vxor.u32 %v523, 2147483648
      %v610 = vxor.u32 %v528, 2147483648
      %v611 = vxor.u32 %v533, 2147483648
      %v612 = vxor.u32 %v538, 2147483648
      %v613 = vxor.u32 %v543, 2147483648
      %v614 = vxor.u32 %v548, 2147483648
      %v615 = vxor.u32 %v553, 2147483648
      %v616 = vxor.u32 %v558, 2147483648
      %v617 = vxor.u32 %v563, 2147483648
      %v618 = vxor.u32 %v568, 2147483648
      %v619 = vxor.u32 %v573, 2147483648
      %v620 = vxor.u32 %v578, 2147483648
      %v621 = vxor.u32 %v583, 2147483648
      %v622 = vxor.u32 %v588, 2147483648
      %v623 = vmul.f32 %v591, 1.442695
      %v624 = vpow.pop %v623
      %v625 = vmul.f32 %v592, 1.442695
      %v626 = vpow.pop %v625
      %v627 = vmul.f32 %v593, 1.442695
      %v628 = vpow.pop %v627
      %v629 = vmul.f32 %v594, 1.442695
      %v630 = vpow.pop %v629
      %v631 = vmul.f32 %v595, 1.442695
      %v632 = vpow.pop %v631
      %v633 = vmul.f32 %v596, 1.442695
      %v634 = vpow.pop %v633
      %v635 = vmul.f32 %v597, 1.442695
      %v636 = vpow.pop %v635
      %v637 = vmul.f32 %v598, 1.442695
      %v638 = vpow.pop %v637
      %v639 = vmul.f32 %v599, 1.442695
      %v640 = vpow.pop %v639
      %v641 = vmul.f32 %v600, 1.442695
      %v642 = vpow.pop %v641
      %v643 = vmul.f32 %v601, 1.442695
      %v644 = vpow.pop %v643
      %v645 = vmul.f32 %v602, 1.442695
      %v646 = vpow.pop %v645
      %v647 = vmul.f32 %v603, 1.442695
      %v648 = vpow.pop %v647
      %v649 = vmul.f32 %v604, 1.442695
      %v650 = vpow.pop %v649
      %v651 = vmul.f32 %v605, 1.442695
      %v652 = vpow.pop %v651
      %v653 = vmul.f32 %v606, 1.442695
      %v654 = vpow.pop %v653
      %v655 = vmul.f32 %v607, 1.442695
      %v656 = vpow.pop %v655
      %v657 = vmul.f32 %v608, 1.442695
      %v658 = vpow.pop %v657
      %v659 = vmul.f32 %v609, 1.442695
      %v660 = vpow.pop %v659
      %v661 = vmul.f32 %v610, 1.442695
      %v662 = vpow.pop %v661
      %v663 = vmul.f32 %v611, 1.442695
      %v664 = vpow.pop %v663
      %v665 = vmul.f32 %v612, 1.442695
      %v666 = vpow.pop %v665
      %v667 = vmul.f32 %v613, 1.442695
      %v668 = vpow.pop %v667
      %v669 = vmul.f32 %v614, 1.442695
      %v670 = vpow.pop %v669
      %v671 = vmul.f32 %v615, 1.442695
      %v672 = vpow.pop %v671
      %v673 = vmul.f32 %v616, 1.442695
      %v674 = vpow.pop %v673
      %v675 = vmul.f32 %v617, 1.442695
      %v676 = vpow.pop %v675
      %v677 = vmul.f32 %v618, 1.442695
      %v678 = vpow.pop %v677
      %v679 = vmul.f32 %v619, 1.442695
      %v680 = vpow.pop %v679
      %v681 = vmul.f32 %v620, 1.442695
      %v682 = vpow.pop %v681
      %v683 = vmul.f32 %v621, 1.442695
      %v684 = vpow.pop %v683
      %v685 = vmul.f32 %v622, 1.442695
      %v686 = vpow.pop %v685
      %v687 = vadd.f32 %v624, 1.0
      %v688 = vadd.f32 %v626, 1.0
      %v689 = vadd.f32 %v628, 1.0
      %v690 = vadd.f32 %v630, 1.0
      %v691 = vadd.f32 %v632, 1.0
      %v692 = vadd.f32 %v634, 1.0
      %v693 = vadd.f32 %v636, 1.0
      %v694 = vadd.f32 %v638, 1.0
      %v695 = vadd.f32 %v640, 1.0
      %v696 = vadd.f32 %v642, 1.0
      %v697 = vadd.f32 %v644, 1.0
      %v698 = vadd.f32 %v646, 1.0
      %v699 = vadd.f32 %v648, 1.0
      %v700 = vadd.f32 %v650, 1.0
      %v701 = vadd.f32 %v652, 1.0
      %v702 = vadd.f32 %v654, 1.0
      %v703 = vadd.f32 %v656, 1.0
      %v704 = vadd.f32 %v658, 1.0
      %v705 = vadd.f32 %v660, 1.0
      %v706 = vadd.f32 %v662, 1.0
      %v707 = vadd.f32 %v664, 1.0
      %v708 = vadd.f32 %v666, 1.0
      %v709 = vadd.f32 %v668, 1.0
      %v710 = vadd.f32 %v670, 1.0
      %v711 = vadd.f32 %v672, 1.0
      %v712 = vadd.f32 %v674, 1.0
      %v713 = vadd.f32 %v676, 1.0
      %v714 = vadd.f32 %v678, 1.0
      %v715 = vadd.f32 %v680, 1.0
      %v716 = vadd.f32 %v682, 1.0
      %v717 = vadd.f32 %v684, 1.0
      %v718 = vadd.f32 %v686, 1.0
      %v719 = vrcp.pop %v687
      %v720 = vmul.f32 1.0, %v719
      %v721 = vrcp.pop %v688
      %v722 = vmul.f32 1.0, %v721
      %v723 = vrcp.pop %v689
      %v724 = vmul.f32 1.0, %v723
      %v725 = vrcp.pop %v690
      %v726 = vmul.f32 1.0, %v725
      %v727 = vrcp.pop %v691
      %v728 = vmul.f32 1.0, %v727
      %v729 = vrcp.pop %v692
      %v730 = vmul.f32 1.0, %v729
      %v731 = vrcp.pop %v693
      %v732 = vmul.f32 1.0, %v731
      %v733 = vrcp.pop %v694
      %v734 = vmul.f32 1.0, %v733
      %v735 = vrcp.pop %v695
      %v736 = vmul.f32 1.0, %v735
      %v737 = vrcp.pop %v696
      %v738 = vmul.f32 1.0, %v737
      %v739 = vrcp.pop %v697
      %v740 = vmul.f32 1.0, %v739
      %v741 = vrcp.pop %v698
      %v742 = vmul.f32 1.0, %v741
      %v743 = vrcp.pop %v699
      %v744 = vmul.f32 1.0, %v743
      %v745 = vrcp.pop %v700
      %v746 = vmul.f32 1.0, %v745
      %v747 = vrcp.pop %v701
      %v748 = vmul.f32 1.0, %v747
      %v749 = vrcp.pop %v702
      %v750 = vmul.f32 1.0, %v749
      %v751 = vrcp.pop %v703
      %v752 = vmul.f32 1.0, %v751
      %v753 = vrcp.pop %v704
      %v754 = vmul.f32 1.0, %v753
      %v755 = vrcp.pop %v705
      %v756 = vmul.f32 1.0, %v755
      %v757 = vrcp.pop %v706
      %v758 = vmul.f32 1.0, %v757
      %v759 = vrcp.pop %v707
      %v760 = vmul.f32 1.0, %v759
      %v761 = vrcp.pop %v708
      %v762 = vmul.f32 1.0, %v761
      %v763 = vrcp.pop %v709
      %v764 = vmul.f32 1.0, %v763
      %v765 = vrcp.pop %v710
      %v766 = vmul.f32 1.0, %v765
      %v767 = vrcp.pop %v711
      %v768 = vmul.f32 1.0, %v767
      %v769 = vrcp.pop %v712
      %v770 = vmul.f32 1.0, %v769
      %v771 = vrcp.pop %v713
      %v772 = vmul.f32 1.0, %v771
      %v773 = vrcp.pop %v714
      %v774 = vmul.f32 1.0, %v773
      %v775 = vrcp.pop %v715
      %v776 = vmul.f32 1.0, %v775
      %v777 = vrcp.pop %v716
      %v778 = vmul.f32 1.0, %v777
      %v779 = vrcp.pop %v717
      %v780 = vmul.f32 1.0, %v779
      %v781 = vrcp.pop %v718
      %v782 = vmul.f32 1.0, %v781
      %v783 = vmul.f32 %v433, %v720
      %v784 = vmul.f32 %v438, %v722
      %v785 = vmul.f32 %v443, %v724
      %v786 = vmul.f32 %v448, %v726
      %v787 = vmul.f32 %v453, %v728
      %v788 = vmul.f32 %v458, %v730
      %v789 = vmul.f32 %v463, %v732
      %v790 = vmul.f32 %v468, %v734
      %v791 = vmul.f32 %v473, %v736
      %v792 = vmul.f32 %v478, %v738
      %v793 = vmul.f32 %v483, %v740
      %v794 = vmul.f32 %v488, %v742
      %v795 = vmul.f32 %v493, %v744
      %v796 = vmul.f32 %v498, %v746
      %v797 = vmul.f32 %v503, %v748
      %v798 = vmul.f32 %v508, %v750
      %v799 = vmul.f32 %v513, %v752
      %v800 = vmul.f32 %v518, %v754
      %v801 = vmul.f32 %v523, %v756
      %v802 = vmul.f32 %v528, %v758
      %v803 = vmul.f32 %v533, %v760
      %v804 = vmul.f32 %v538, %v762
      %v805 = vmul.f32 %v543, %v764
      %v806 = vmul.f32 %v548, %v766
      %v807 = vmul.f32 %v553, %v768
      %v808 = vmul.f32 %v558, %v770
      %v809 = vmul.f32 %v563, %v772
      %v810 = vmul.f32 %v568, %v774
      %v811 = vmul.f32 %v573, %v776
      %v812 = vmul.f32 %v578, %v778
      %v813 = vmul.f32 %v583, %v780
      %v814 = vmul.f32 %v588, %v782
      %vm815 = vcmask 64512
      %816 = vst.msk [vmem:[%s223] sm:$0xff] %vm815, %v783
      %817 = vst.msk [vmem:[%s223 + $0x8] sm:$0xff] %vm815, %v784
      %818 = vst.msk [vmem:[%s223 + $0x10] sm:$0xff] %vm815, %v785
      %819 = vst.msk [vmem:[%s223 + $0x18] sm:$0xff] %vm815, %v786
      %820 = vst.msk [vmem:[%s223 + $0x20] sm:$0xff] %vm815, %v787
      %821 = vst.msk [vmem:[%s223 + $0x28] sm:$0xff] %vm815, %v788
      %822 = vst.msk [vmem:[%s223 + $0x30] sm:$0xff] %vm815, %v789
      %823 = vst.msk [vmem:[%s223 + $0x38] sm:$0xff] %vm815, %v790
      %824 = vst.msk [vmem:[%s223 + $0x40] sm:$0xff] %vm815, %v791
      %825 = vst.msk [vmem:[%s223 + $0x48] sm:$0xff] %vm815, %v792
      %826 = vst.msk [vmem:[%s223 + $0x50] sm:$0xff] %vm815, %v793
      %827 = vst.msk [vmem:[%s223 + $0x58] sm:$0xff] %vm815, %v794
      %828 = vst.msk [vmem:[%s223 + $0x60] sm:$0xff] %vm815, %v795
      %829 = vst.msk [vmem:[%s223 + $0x68] sm:$0xff] %vm815, %v796
      %830 = vst.msk [vmem:[%s223 + $0x70] sm:$0xff] %vm815, %v797
      %831 = vst.msk [vmem:[%s223 + $0x78] sm:$0xff] %vm815, %v798
      %832 = vst.msk [vmem:[%s223 + $0x80] sm:$0xff] %vm815, %v799
      %833 = vst.msk [vmem:[%s223 + $0x88] sm:$0xff] %vm815, %v800
      %834 = vst.msk [vmem:[%s223 + $0x90] sm:$0xff] %vm815, %v801
      %835 = vst.msk [vmem:[%s223 + $0x98] sm:$0xff] %vm815, %v802
      %836 = vst.msk [vmem:[%s223 + $0xa0] sm:$0xff] %vm815, %v803
      %837 = vst.msk [vmem:[%s223 + $0xa8] sm:$0xff] %vm815, %v804
      %838 = vst.msk [vmem:[%s223 + $0xb0] sm:$0xff] %vm815, %v805
      %839 = vst.msk [vmem:[%s223 + $0xb8] sm:$0xff] %vm815, %v806
      %840 = vst.msk [vmem:[%s223 + $0xc0] sm:$0xff] %vm815, %v807
      %841 = vst.msk [vmem:[%s223 + $0xc8] sm:$0xff] %vm815, %v808
      %842 = vst.msk [vmem:[%s223 + $0xd0] sm:$0xff] %vm815, %v809
      %843 = vst.msk [vmem:[%s223 + $0xd8] sm:$0xff] %vm815, %v810
      %844 = vst.msk [vmem:[%s223 + $0xe0] sm:$0xff] %vm815, %v811
      %845 = vst.msk [vmem:[%s223 + $0xe8] sm:$0xff] %vm815, %v812
      %846 = vst.msk [vmem:[%s223 + $0xf0] sm:$0xff] %vm815, %v813
      %847 = vst.msk [vmem:[%s223 + $0xf8] sm:$0xff] %vm815, %v814
      %s848 = smul.u32 32, %s18
      %p849 = scmp.lt.s32.totalorder %s848, 63
      %s850 = scalar_select %p849, %s848, 63
      %p851 = scmp.lt.s32.totalorder %s19, 0
      %s852 = scalar_select %p851, %s19, 0
      %s853 = sadd.s32 %s852, %s850
      %s854 = smul.addr %s853, 8
      %s855 = scalar_lea.vmem %s3, %s854
      // Predicated region
      $region33: #{tpu_custom_call.1} parent=31 // pred_check
        %p856 = pneg %p124
      $region34: #{tpu_custom_call.1} parent=31 // pred_check_branch
        %858 = sbr.rel (%p856) target = $region36
      $region35: #{tpu_custom_call.1} parent=31 // pred_region
        %s859 = smul.u32 32, %s18
      $region36: #{tpu_custom_call.1} parent=31 // pred_fallthru
        _
    $region32: #{tpu_custom_call.1} parent=5 // pred_fallthru
      _
    %p860 = scmp.le.s32.totalorder 2, %s9
    // Predicated region
    $region37: #{tpu_custom_call.1} parent=5 // pred_check
      %p861 = pneg %p860
    $region38: #{tpu_custom_call.1} parent=5 // pred_check_branch
      %863 = sbr.rel (%p861) target = $region40
    $region39: #{tpu_custom_call.1} parent=5 // pred_region
      %s864 = ssub.s32 %s9, 2
      // Predicated region
      $region41: #{tpu_custom_call.1} parent=39 // pred_check
        %p865 = pneg %p130
      $region42: #{tpu_custom_call.1} parent=39 // pred_check_branch
        %867 = sbr.rel (%p865) target = $region44
      $region43: #{tpu_custom_call.1} parent=39 // pred_region
        %s868 = smul.u32 32, %s20
        %p869 = scmp.lt.s32.totalorder %s868, 63
        %s870 = scalar_select %p869, %s868, 63
        %p871 = scmp.lt.s32.totalorder %s21, 0
        %s872 = scalar_select %p871, %s21, 0
        %s873 = sadd.s32 %s872, %s870
        %s874 = smul.addr %s873, 8
        %s875 = scalar_lea.vmem %s3, %s874
      $region44: #{tpu_custom_call.1} parent=39 // pred_fallthru
        _
    $region40: #{tpu_custom_call.1} parent=5 // pred_fallthru
      _
  $region6: #{tpu_custom_call.1} parent=0 // loop_footer
    %s13 = sadd.s32 1, %s9
  $region7: #{tpu_custom_call.1} parent=0 // loop_footer_branch
    %8 = sbr.rel target = $region3
  $region8: #{tpu_custom_call.1} parent=0 // loop_exit
    _

</llo_original>
